<compile_context>
chip_gen: v6e
topology: v6e:2x2x1
jax: 0.10.0
libtpu: 0.0.40
codegen_flags: <defaults>
</compile_context>

<pallas_src>
import jax
import jax.numpy as jnp
from jax.experimental import pallas as pl
from jax.experimental.pallas import tpu as pltpu

_LANE = 128
_ROW = 16  # row-tile alignment: satisfies both f32 (8,128) and bf16 (16,128) packing


def _round_up(a: int, b: int) -> int:
    return -(-a // b) * b


def _cdiv(a: int, b: int) -> int:
    return -(-a // b)


# --------------------------------------------------------------------------- #
# Kernels
# --------------------------------------------------------------------------- #
def _ff_resident_kernel(x_ref, w1_ref, b1_ref, w2_ref, b2_ref, o_ref):
    # Whole W1/W2 resident in VMEM; one matmul pair per row tile.
    h = jnp.dot(x_ref[...], w1_ref[...], preferred_element_type=jnp.float32)
    h = jnp.maximum(h + b1_ref[...], 0.0)                      # bias + ReLU in f32
    y = jnp.dot(h.astype(w2_ref.dtype), w2_ref[...],
                preferred_element_type=jnp.float32)
    o_ref[...] = (y + b2_ref[...]).astype(o_ref.dtype)


def _ff_stream_f32_kernel(x_ref, w1_ref, b1_ref, w2_ref, b2_ref, o_ref):
    # Hidden axis streamed; f32 output tile doubles as the accumulator.
    h_idx = pl.program_id(1)

    @pl.when(h_idx == 0)
    def _init():
        o_ref[...] = jnp.broadcast_to(b2_ref[...], o_ref.shape)  # b2 added exactly once

    h = jnp.dot(x_ref[...], w1_ref[...], preferred_element_type=jnp.float32)
    h = jnp.maximum(h + b1_ref[...], 0.0)
    o_ref[...] += jnp.dot(h.astype(w2_ref.dtype), w2_ref[...],
                          preferred_element_type=jnp.float32)


def _ff_stream_acc_kernel(x_ref, w1_ref, b1_ref, w2_ref, b2_ref, o_ref, acc_ref):
    # Hidden axis streamed; separate f32 accumulator (non-f32 output dtype).
    h_idx = pl.program_id(1)

    @pl.when(h_idx == 0)
    def _init():
        acc_ref[...] = jnp.zeros_like(acc_ref)

    h = jnp.dot(x_ref[...], w1_ref[...], preferred_element_type=jnp.float32)
    h = jnp.maximum(h + b1_ref[...], 0.0)
    acc_ref[...] += jnp.dot(h.astype(w2_ref.dtype), w2_ref[...],
                            preferred_element_type=jnp.float32)

    @pl.when(h_idx == pl.num_programs(1) - 1)
    def _finalize():
        o_ref[...] = (acc_ref[...] + b2_ref[...]).astype(o_ref.dtype)


# --------------------------------------------------------------------------- #
# Tiling / VMEM policy (generation-aware)
# --------------------------------------------------------------------------- #
def _vmem_capacity_bytes() -> int:
    try:
        return int(pltpu.get_tpu_info().vmem_capacity_bytes)
    except Exception:
        return 64 << 20  # conservative (v7x per-core) fallback


def _select_config(M, E_pad, H_pad, cmp_isz, out_isz, *, tile_h=None,
                   force_streaming=False):
    vmem_cap = _vmem_capacity_bytes()
    budget = int(0.70 * vmem_cap)  # headroom for compiler temps / spill

    def resident_bytes(tm):
        wts = 2 * cmp_isz * (2 * E_pad * H_pad + H_pad + E_pad)  # dbl-buffered W1,W2,b1,b2
        xo = 2 * tm * E_pad * (cmp_isz + out_isz)                # dbl-buffered x / out tiles
        hid = tm * H_pad * (4 + cmp_isz)                         # f32 hidden + low-prec copy
        tmp = tm * E_pad * 4                                     # f32 result before cast
        return wts + xo + hid + tmp

    def stream_bytes(tm, th, need_acc):
        wts = 2 * cmp_isz * (2 * E_pad * th + th + E_pad)
        xo = 2 * tm * E_pad * (cmp_isz + out_isz)
        hid = tm * th * (4 + cmp_isz)
        acc = tm * E_pad * 4 if need_acc else 0
        return wts + xo + hid + acc

    tm_cands = (1024, 512, 384, 256, 128, 64, 32, 16)
    need_acc = out_isz != 4

    resident, tm_cap, th, need = False, None, None, 0
    if not force_streaming:
        for tm in tm_cands:
            if resident_bytes(tm) <= budget:
                resident, tm_cap, need = True, tm, resident_bytes(tm)
                break
        if resident and tm_cap < 128 and M > 128:
            resident = False  # weights barely fit -> streaming allows larger row tiles

    if not resident:
        th_cands = ([int(tile_h)] if tile_h is not None else
                    sorted({c for c in (H_pad, 4096, 2048, 1024, 512, 256, 128)
                            if c <= H_pad and H_pad % c == 0}, reverse=True))
        for tm in tm_cands:
            found = False
            for th_try in th_cands:
                if stream_bytes(tm, th_try, need_acc) <= budget:
                    tm_cap, th = tm, th_try
                    need = stream_bytes(tm, th_try, need_acc)
                    found = True
                    break
            if found:
                break
        if th is None:  # last resort: smallest tiles
            tm_cap, th = 16, th_cands[-1]
            need = stream_bytes(tm_cap, th, need_acc)

    # Row tiling: minimal padding (TM derived from M), >=2 row tiles when possible
    # so both v7x TensorCores get work ("parallel" M axis); harmless on 1-TC parts.
    M_al = _round_up(max(M, 1), _ROW)
    n_min = 2 if M_al >= 2 * _ROW else 1
    n_tiles = max(n_min, _cdiv(M_al, tm_cap))
    TM = _round_up(_cdiv(M_al, n_tiles), _ROW)
    M_pad = TM * n_tiles

    vmem_limit = min(vmem_cap, max(32 << 20, int(1.3 * need)))
    return resident, TM, M_pad, th, need_acc, vmem_limit


# --------------------------------------------------------------------------- #
# Wrapper
# --------------------------------------------------------------------------- #
def feed_forward(x, w1, b1, w2, b2, *, compute_dtype=jnp.bfloat16,
                 force_streaming=False, tile_h=None):
    """x: (B, T, E); w1: (E, 4E); b1: (4E,); w2: (4E, E); b2: (E,) -> (B, T, E).

    Linear -> ReLU -> Linear -> Dropout(eval).  MXU operands are cast to
    `compute_dtype` (bf16 default); accumulation and bias adds stay f32.
    """
    B, T, E = x.shape
    H = w1.shape[1]
    M = B * T
    out_dtype = x.dtype

    E_pad = _round_up(E, _LANE)
    H_pad = _round_up(H, _LANE)
    cmp_isz = jnp.dtype(compute_dtype).itemsize
    out_isz = jnp.dtype(out_dtype).itemsize

    resident, TM, M_pad, TH, need_acc, vmem_limit = _select_config(
        M, E_pad, H_pad, cmp_isz, out_isz,
        tile_h=tile_h, force_streaming=force_streaming)

    # Pad to lane-dense shapes; strip in the wrapper.  Zero padding is exact:
    # padded hidden columns give relu(0)=0 and contribute nothing to the output.
    x2 = jnp.pad(x.reshape(M, E).astype(compute_dtype),
                 ((0, M_pad - M), (0, E_pad - E)))
    w1p = jnp.pad(w1.astype(compute_dtype), ((0, E_pad - E), (0, H_pad - H)))
    b1p = jnp.pad(b1.astype(jnp.float32), (0, H_pad - H)).reshape(1, H_pad)
    w2p = jnp.pad(w2.astype(compute_dtype), ((0, H_pad - H), (0, E_pad - E)))
    b2p = jnp.pad(b2.astype(jnp.float32), (0, E_pad - E)).reshape(1, E_pad)

    out_shape = jax.ShapeDtypeStruct((M_pad, E_pad), out_dtype)

    if resident:
        out = pl.pallas_call(
            _ff_resident_kernel,
            out_shape=out_shape,
            grid_spec=pltpu.PrefetchScalarGridSpec(
                num_scalar_prefetch=0,
                grid=(M_pad // TM,),
                in_specs=[
                    pl.BlockSpec((TM, E_pad), lambda i: (i, 0)),      # x rows
                    pl.BlockSpec((E_pad, H_pad), lambda i: (0, 0)),   # W1 (VMEM-resident)
                    pl.BlockSpec((1, H_pad), lambda i: (0, 0)),       # b1
                    pl.BlockSpec((H_pad, E_pad), lambda i: (0, 0)),   # W2 (VMEM-resident)
                    pl.BlockSpec((1, E_pad), lambda i: (0, 0)),       # b2
                ],
                out_specs=pl.BlockSpec((TM, E_pad), lambda i: (i, 0)),
            ),
            compiler_params=pltpu.CompilerParams(
                dimension_semantics=("parallel",),
                vmem_limit_bytes=vmem_limit,
            ),
        )(x2, w1p, b1p, w2p, b2p)
    else:
        kernel = _ff_stream_acc_kernel if need_acc else _ff_stream_f32_kernel
        scratch = [pltpu.VMEM((TM, E_pad), jnp.float32)] if need_acc else []
        out = pl.pallas_call(
            kernel,
            out_shape=out_shape,
            grid_spec=pltpu.PrefetchScalarGridSpec(
                num_scalar_prefetch=0,
                grid=(M_pad // TM, H_pad // TH),
                in_specs=[
                    pl.BlockSpec((TM, E_pad), lambda i, h: (i, 0)),   # x rows (resident over h)
                    pl.BlockSpec((E_pad, TH), lambda i, h: (0, h)),   # W1 column slab
                    pl.BlockSpec((1, TH), lambda i, h: (0, h)),       # b1 slab
                    pl.BlockSpec((TH, E_pad), lambda i, h: (h, 0)),   # W2 row slab
                    pl.BlockSpec((1, E_pad), lambda i, h: (0, 0)),    # b2
                ],
                out_specs=pl.BlockSpec((TM, E_pad), lambda i, h: (i, 0)),
                scratch_shapes=scratch,
            ),
            compiler_params=pltpu.CompilerParams(
                dimension_semantics=("parallel", "arbitrary"),
                vmem_limit_bytes=vmem_limit,
            ),
        )(x2, w1p, b1p, w2p, b2p)

    # TODO(synk): training-mode dropout (pltpu.prng_seed + pltpu.stateful_bernoulli
    # with 1/(1-p) scaling) is omitted; eval/inference semantics (identity) are used.
    return out[:M, :E].reshape(B, T, E)


# --------------------------------------------------------------------------- #
# Params / references / self-test
# --------------------------------------------------------------------------- #
def init_params(key, num_embed):
    """Deterministic init mimicking nn.Linear's uniform(-1/sqrt(fan_in), ...)."""
    hidden = num_embed * 4
    k1, k2, k3, k4 = jax.random.split(key, 4)
    bound1 = 1.0 / (num_embed ** 0.5)
    bound2 = 1.0 / (hidden ** 0.5)
    w1 = jax.random.uniform(k1, (num_embed, hidden), jnp.float32, -bound1, bound1)
    b1 = jax.random.uniform(k2, (hidden,), jnp.float32, -bound1, bound1)
    w2 = jax.random.uniform(k3, (hidden, num_embed), jnp.float32, -bound2, bound2)
    b2 = jax.random.uniform(k4, (num_embed,), jnp.float32, -bound2, bound2)
    return w1, b1, w2, b2


def _reference(x, w1, b1, w2, b2, compute_dtype=jnp.bfloat16):
    """Matches the kernel's numerics: bf16 MXU operands, f32 accumulation."""
    B, T, E = x.shape
    xc = x.reshape(-1, E).astype(compute_dtype)
    h = jnp.dot(xc, w1.astype(compute_dtype), preferred_element_type=jnp.float32)
    h = jnp.maximum(h + b1.astype(jnp.float32), 0.0)
    y = jnp.dot(h.astype(compute_dtype), w2.astype(compute_dtype),
                preferred_element_type=jnp.float32) + b2.astype(jnp.float32)
    return y.astype(x.dtype).reshape(B, T, E)


def _reference_f32(x, w1, b1, w2, b2):
    B, T, E = x.shape
    y = jnp.maximum(x.reshape(-1, E).astype(jnp.float32) @ w1 + b1, 0.0) @ w2 + b2
    return y.astype(x.dtype).reshape(B, T, E)


if __name__ == "__main__":
    key = jax.random.PRNGKey(0)

    # Case 1: module-sized toy shapes (batch=2, seq=8, num_embed=32 -> hidden=128).
    B, T, E = 2, 8, 32
    kx, kp, key = jax.random.split(key, 3)
    x = jax.random.normal(kx, (B, T, E), jnp.float32)
    w1, b1, w2, b2 = init_params(kp, E)
    y = jax.block_until_ready(feed_forward(x, w1, b1, w2, b2))
    assert y.shape == (B, T, E)
    assert jnp.allclose(y, _reference(x, w1, b1, w2, b2), atol=5e-3, rtol=5e-3)
    # Loose sanity check against the pure-f32 module semantics (bf16 MXU path).
    assert jnp.allclose(y, _reference_f32(x, w1, b1, w2, b2), atol=1e-1, rtol=1e-1)

    # Case 2: num_embed=256 -> hidden=1024; weight-resident fast path (default).
    B2, T2, E2 = 2, 8, 256
    kx2, kp2, key = jax.random.split(key, 3)
    x2 = jax.random.normal(kx2, (B2, T2, E2), jnp.float32)
    w1b, b1b, w2b, b2b = init_params(kp2, E2)
    ref2 = _reference(x2, w1b, b1b, w2b, b2b)
    y2 = jax.block_until_ready(feed_forward(x2, w1b, b1b, w2b, b2b))
    assert y2.shape == (B2, T2, E2)
    assert jnp.allclose(y2, ref2, atol=5e-3, rtol=5e-3)

    # Case 3: forced hidden-streaming path (4 reduction steps; f32 output is
    # the accumulator, no scratch).
    y3 = jax.block_until_ready(
        feed_forward(x2, w1b, b1b, w2b, b2b, force_streaming=True, tile_h=256))
    assert jnp.allclose(y3, ref2, atol=5e-3, rtol=5e-3)

    # Case 4: bf16 activations, forced streaming -> f32 scratch-accumulator path.
    xb = x2.astype(jnp.bfloat16)
    y4 = jax.block_until_ready(
        feed_forward(xb, w1b, b1b, w2b, b2b, force_streaming=True, tile_h=256))
    ref4 = _reference(xb, w1b, b1b, w2b, b2b)
    assert y4.dtype == jnp.bfloat16
    assert jnp.allclose(y4.astype(jnp.float32), ref4.astype(jnp.float32),
                        atol=2e-2, rtol=2e-2)

    print("KERNEL_OK")
</pallas_src>

<mosaic_0001>
module attributes {stable_mosaic.version = 11 : i64} {
  func.func @_ff_resident_kernel(%arg0: i32, %arg1: memref<16x128xbf16, #tpu.memory_space<vmem>>, %arg2: memref<128x128xbf16, #tpu.memory_space<vmem>>, %arg3: memref<1x128xf32, #tpu.memory_space<vmem>>, %arg4: memref<128x128xbf16, #tpu.memory_space<vmem>>, %arg5: memref<1x128xf32, #tpu.memory_space<vmem>>, %arg6: memref<16x128xf32, #tpu.memory_space<vmem>>) attributes {dimension_semantics = [#tpu.dimension_semantics<parallel>], iteration_bounds = array<i64: 1>, scalar_prefetch = 0 : i64, scratch_operands = 0 : i64, tpu.core_type = #tpu.core_type<tc>, window_params = [{transform_indices = @transform_0, window_bounds = array<i64: 16, 128>}, {pipeline_mode = #tpu.pipeline_mode<synchronous>, transform_indices = @transform_1, window_bounds = array<i64: 128, 128>}, {pipeline_mode = #tpu.pipeline_mode<synchronous>, transform_indices = @transform_2, window_bounds = array<i64: 1, 128>}, {pipeline_mode = #tpu.pipeline_mode<synchronous>, transform_indices = @transform_3, window_bounds = array<i64: 128, 128>}, {pipeline_mode = #tpu.pipeline_mode<synchronous>, transform_indices = @transform_4, window_bounds = array<i64: 1, 128>}, {transform_indices = @transform_5, window_bounds = array<i64: 16, 128>}]} {
    %c0 = arith.constant 0 : index
    %c0_0 = arith.constant 0 : index
    %0 = vector.load %arg1[%c0, %c0_0] : memref<16x128xbf16, #tpu.memory_space<vmem>>, vector<16x128xbf16>
    %c0_1 = arith.constant 0 : index
    %c0_2 = arith.constant 0 : index
    %1 = vector.load %arg2[%c0_1, %c0_2] : memref<128x128xbf16, #tpu.memory_space<vmem>>, vector<128x128xbf16>
    %cst = arith.constant dense<0.000000e+00> : vector<16x128xf32>
    %2 = tpu.matmul %0, %1, %cst {dimension_numbers = #tpu.dot_dimension_numbers<[1], [0], [0], [1], [0, 0, 1, 1], [], []>} : vector<16x128xbf16>, vector<128x128xbf16>, vector<16x128xf32> -> vector<16x128xf32>
    %c0_3 = arith.constant 0 : index
    %c0_4 = arith.constant 0 : index
    %3 = vector.load %arg3[%c0_3, %c0_4] : memref<1x128xf32, #tpu.memory_space<vmem>>, vector<1x128xf32>
    %4 = vector.broadcast %3 : vector<1x128xf32> to vector<16x128xf32>
    %5 = arith.addf %2, %4 : vector<16x128xf32>
    %cst_5 = arith.constant 0.000000e+00 : f32
    %6 = vector.broadcast %cst_5 : f32 to vector<16x128xf32>
    %7 = arith.maximumf %5, %6 : vector<16x128xf32>
    %8 = arith.truncf %7 : vector<16x128xf32> to vector<16x128xbf16>
    %c0_6 = arith.constant 0 : index
    %c0_7 = arith.constant 0 : index
    %9 = vector.load %arg4[%c0_6, %c0_7] : memref<128x128xbf16, #tpu.memory_space<vmem>>, vector<128x128xbf16>
    %cst_8 = arith.constant dense<0.000000e+00> : vector<16x128xf32>
    %10 = tpu.matmul %8, %9, %cst_8 {dimension_numbers = #tpu.dot_dimension_numbers<[1], [0], [0], [1], [0, 0, 1, 1], [], []>} : vector<16x128xbf16>, vector<128x128xbf16>, vector<16x128xf32> -> vector<16x128xf32>
    %c0_9 = arith.constant 0 : index
    %c0_10 = arith.constant 0 : index
    %11 = vector.load %arg5[%c0_9, %c0_10] : memref<1x128xf32, #tpu.memory_space<vmem>>, vector<1x128xf32>
    %12 = vector.broadcast %11 : vector<1x128xf32> to vector<16x128xf32>
    %13 = arith.addf %10, %12 : vector<16x128xf32>
    %c0_11 = arith.constant 0 : index
    %c0_12 = arith.constant 0 : index
    %14 = vector.load %arg6[%c0_11, %c0_12] : memref<16x128xf32, #tpu.memory_space<vmem>>, vector<16x128xf32>
    tpu.vector_store %arg6[%c0_11, %c0_12], %13 {strides = array<i32>} : memref<16x128xf32, #tpu.memory_space<vmem>>, vector<16x128xf32>,
    return
  }
  func.func @transform_0(%arg0: i32) -> (i32, i32) {
    %c0_i32 = arith.constant 0 : i32
    %c0_i32_0 = arith.constant 0 : i32
    return %arg0, %c0_i32 : i32, i32
  }
  func.func @transform_1(%arg0: i32) -> (i32, i32) {
    %c0_i32 = arith.constant 0 : i32
    %c0_i32_0 = arith.constant 0 : i32
    %c0_i32_1 = arith.constant 0 : i32
    return %c0_i32, %c0_i32_0 : i32, i32
  }
  func.func @transform_2(%arg0: i32) -> (i32, i32) {
    %c0_i32 = arith.constant 0 : i32
    %c0_i32_0 = arith.constant 0 : i32
    %c0_i32_1 = arith.constant 0 : i32
    return %c0_i32, %c0_i32_0 : i32, i32
  }
  func.func @transform_3(%arg0: i32) -> (i32, i32) {
    %c0_i32 = arith.constant 0 : i32
    %c0_i32_0 = arith.constant 0 : i32
    %c0_i32_1 = arith.constant 0 : i32
    return %c0_i32, %c0_i32_0 : i32, i32
  }
  func.func @transform_4(%arg0: i32) -> (i32, i32) {
    %c0_i32 = arith.constant 0 : i32
    %c0_i32_0 = arith.constant 0 : i32
    %c0_i32_1 = arith.constant 0 : i32
    return %c0_i32, %c0_i32_0 : i32, i32
  }
  func.func @transform_5(%arg0: i32) -> (i32, i32) {
    %c0_i32 = arith.constant 0 : i32
    %c0_i32_0 = arith.constant 0 : i32
    return %arg0, %c0_i32 : i32, i32
  }
}

</mosaic_0001>

<llo_original>
// kernel: tpu_custom_call.1
$region0: #{tpu_custom_call.1}
  #allocation0 [shape = 'u32[]', space=smem, size = 0x4, offset = 0x4, fixed_abs, tag = 'smem constant byte address 0x4 - core index']
  #allocation1 [shape = 'u32[144,128]{1,0:T(1,128)}', space=vmem, size = 0x12000, scoped, tag = 'internal scratch']
  %s0 = inlined_call_operand.hbm [shape: bf16[16,128], index: 0, kind: input, shape index: {}]
  %s1 = inlined_call_operand.hbm [shape: bf16[128,128], index: 1, kind: input, shape index: {}]
  %s2 = inlined_call_operand.vmem [shape: f32[1,128], index: 2, kind: input, shape index: {}]
  %s3 = inlined_call_operand.hbm [shape: bf16[128,128], index: 3, kind: input, shape index: {}]
  %s4 = inlined_call_operand.vmem [shape: f32[1,128], index: 4, kind: input, shape index: {}]
  %s5 = inlined_call_operand.hbm [shape: f32[16,128], index: 5, kind: output, shape index: {}]
  %s6 = sld [smem:[#allocation0]]
  $region42: #{tpu_custom_call.1} parent=0
    _
  %s8 = ssub.s32 1, %s6
  %s9 = scalar_select 0, %s8, %s6
  $region1: #{tpu_custom_call.1} parent=0
    #allocation2 [shape = 'u8[4096]{0}', space=vmem, size = 0x1000, scoped, tag = 'input window, operand 0, single buffered']
    #allocation3 [shape = 's32[1]{0}', space=sflag, size = 0x4, scoped, tag = 'scoped memory for tpu_custom_call.1']
    #allocation4 [shape = 's32[1]{0}', space=sflag, size = 0x4, scoped, tag = 'scoped memory for tpu_custom_call.1']
    #allocation5 [shape = 'u8[32768]{0}', space=vmem, size = 0x8000, scoped, tag = 'input window, operand 1, single buffered']
    #allocation6 [shape = 's32[1]{0}', space=sflag, size = 0x4, scoped, tag = 'scoped memory for tpu_custom_call.1']
    #allocation7 [shape = 'u8[32768]{0}', space=vmem, size = 0x8000, scoped, tag = 'input window, operand 3, single buffered']
    #allocation8 [shape = 'u8[8192]{0}', space=vmem, size = 0x2000, scoped, tag = 'output window, operand 0, single buffered']
    %10 = vsyncpa [#allocation3], 0
    %11 = vsyncpa [#allocation6], 0
    %12 = vsyncpa [#allocation4], 0
    // Predicated region
    $region2: #{tpu_custom_call.1} parent=1 // pred_check
      _
    $region3: #{tpu_custom_call.1} parent=1 // pred_check_branch
      %14 = sbr.rel (0) target = $region5
    $region4: #{tpu_custom_call.1} parent=1 // pred_region
      %s16 = ssub.s32 128, 128
      %17 = vsyncadd [#allocation3], %s16
      %s18 = sshll.u32 [#allocation2], 4
      %s19 = int_to_ptr.vmem [resolvable:$true] %s18
      %24 = dma.hbm_to_vmem [thread:$0]  %s0, 128, %s19, [#allocation3], 64, 64, 4
    $region5: #{tpu_custom_call.1} parent=1 // pred_fallthru
      _
    // Predicated region
    $region6: #{tpu_custom_call.1} parent=1 // pred_check
      _
    $region7: #{tpu_custom_call.1} parent=1 // pred_check_branch
      %26 = sbr.rel (0) target = $region9
    $region8: #{tpu_custom_call.1} parent=1 // pred_region
      %s28 = ssub.s32 1024, 1024
      %29 = vsyncadd [#allocation6], %s28
      %s30 = sshll.u32 [#allocation5], 4
      %s31 = int_to_ptr.vmem [resolvable:$true] %s30
      %36 = dma.hbm_to_vmem [thread:$0]  %s1, 1024, %s31, [#allocation6], 64, 64, 4
    $region9: #{tpu_custom_call.1} parent=1 // pred_fallthru
      _
    // Predicated region
    $region10: #{tpu_custom_call.1} parent=1 // pred_check
      _
    $region11: #{tpu_custom_call.1} parent=1 // pred_check_branch
      %38 = sbr.rel (0) target = $region13
    $region12: #{tpu_custom_call.1} parent=1 // pred_region
      _
    $region13: #{tpu_custom_call.1} parent=1 // pred_fallthru
      _
    // Predicated region
    $region14: #{tpu_custom_call.1} parent=1 // pred_check
      _
    $region15: #{tpu_custom_call.1} parent=1 // pred_check_branch
      %40 = sbr.rel (0) target = $region17
    $region16: #{tpu_custom_call.1} parent=1 // pred_region
      %s42 = ssub.s32 1024, 1024
      %43 = vsyncadd [#allocation6], %s42
      %s44 = sshll.u32 [#allocation7], 4
      %s45 = int_to_ptr.vmem [resolvable:$true] %s44
      %50 = dma.hbm_to_vmem [thread:$0]  %s3, 1024, %s45, [#allocation6], 64, 64, 4
    $region17: #{tpu_custom_call.1} parent=1 // pred_fallthru
      _
    // Predicated region
    $region18: #{tpu_custom_call.1} parent=1 // pred_check
      _
    $region19: #{tpu_custom_call.1} parent=1 // pred_check_branch
      %52 = sbr.rel (0) target = $region21
    $region20: #{tpu_custom_call.1} parent=1 // pred_region
      _
    $region21: #{tpu_custom_call.1} parent=1 // pred_fallthru
      _
    // Predicated region
    $region22: #{tpu_custom_call.1} parent=1 // pred_check
      _
    $region23: #{tpu_custom_call.1} parent=1 // pred_check_branch
      %54 = sbr.rel (0) target = $region25
    $region24: #{tpu_custom_call.1} parent=1 // pred_region
      %55 = dma.done [#allocation3], 128
    $region25: #{tpu_custom_call.1} parent=1 // pred_fallthru
      _
    // Predicated region
    $region26: #{tpu_custom_call.1} parent=1 // pred_check
      _
    $region27: #{tpu_custom_call.1} parent=1 // pred_check_branch
      %57 = sbr.rel (0) target = $region29
    $region28: #{tpu_custom_call.1} parent=1 // pred_region
      %58 = dma.done [#allocation6], 1024
    $region29: #{tpu_custom_call.1} parent=1 // pred_fallthru
      _
    // Predicated region
    $region30: #{tpu_custom_call.1} parent=1 // pred_check
      _
    $region31: #{tpu_custom_call.1} parent=1 // pred_check_branch
      %60 = sbr.rel (0) target = $region33
    $region32: #{tpu_custom_call.1} parent=1 // pred_region
      %61 = dma.done [#allocation6], 1024
    $region33: #{tpu_custom_call.1} parent=1 // pred_fallthru
      _
    %v63 = vld [vmem:[#allocation2] sm:$0xf]
    %v64 = vld [vmem:[#allocation2 + $0x4] sm:$0xf]
    %v65 = vld [vmem:[#allocation5] sm:$0xf]
    %v66 = vld [vmem:[#allocation5 + $0x4] sm:$0xf]
    %v67 = vld [vmem:[#allocation5 + $0x8] sm:$0xf]
    %v68 = vld [vmem:[#allocation5 + $0xc] sm:$0xf]
    %v69 = vld [vmem:[#allocation5 + $0x10] sm:$0xf]
    %v70 = vld [vmem:[#allocation5 + $0x14] sm:$0xf]
    %v71 = vld [vmem:[#allocation5 + $0x18] sm:$0xf]
    %v72 = vld [vmem:[#allocation5 + $0x1c] sm:$0xf]
    %v73 = vld [vmem:[#allocation5 + $0x20] sm:$0xf]
    %v74 = vld [vmem:[#allocation5 + $0x24] sm:$0xf]
    %v75 = vld [vmem:[#allocation5 + $0x28] sm:$0xf]
    %v76 = vld [vmem:[#allocation5 + $0x2c] sm:$0xf]
    %v77 = vld [vmem:[#allocation5 + $0x30] sm:$0xf]
    %v78 = vld [vmem:[#allocation5 + $0x34] sm:$0xf]
    %v79 = vld [vmem:[#allocation5 + $0x38] sm:$0xf]
    %v80 = vld [vmem:[#allocation5 + $0x3c] sm:$0xf]
    %v81 = vld [vmem:[%s2] sm:$0x1]
    %v83 = vlaneseq
    %v84 = vshrl.u32 %v83, 7
    %v85 = vsub.s32 0, %v84
    %v86 = vrot.slane %v81, %v85
    %v90 = vunpack.c.l.b16 %v63
    %v91 = vunpack.c.l.b16 %v64
    %v92 = vpack.c.b16 %v91, %v90
    %v110 = vunpack.c.l.b16 %v65
    %v111 = vunpack.c.l.b16 %v66
    %v112 = vunpack.c.l.b16 %v67
    %v113 = vunpack.c.l.b16 %v68
    %v114 = vunpack.c.l.b16 %v69
    %v115 = vunpack.c.l.b16 %v70
    %v116 = vunpack.c.l.b16 %v71
    %v117 = vunpack.c.l.b16 %v72
    %v118 = vunpack.c.l.b16 %v73
    %v119 = vunpack.c.l.b16 %v74
    %v120 = vunpack.c.l.b16 %v75
    %v121 = vunpack.c.l.b16 %v76
    %v122 = vunpack.c.l.b16 %v77
    %v123 = vunpack.c.l.b16 %v78
    %v124 = vunpack.c.l.b16 %v79
    %v125 = vunpack.c.l.b16 %v80
    %v126 = vpack.c.b16 %v111, %v110
    %v127 = vpack.c.b16 %v113, %v112
    %v128 = vpack.c.b16 %v115, %v114
    %v129 = vpack.c.b16 %v117, %v116
    %v130 = vpack.c.b16 %v119, %v118
    %v131 = vpack.c.b16 %v121, %v120
    %v132 = vpack.c.b16 %v123, %v122
    %v133 = vpack.c.b16 %v125, %v124
    %142 = vmatprep.subr.bf16.mxu0 0
    %143 = vmatpush1.bf16.msra.mxu0 %v133
    %144 = vmatprep.subr.bf16.mxu0 0
    %145 = vmatpush1.bf16.msra.mxu0 %v132
    %146 = vmatprep.subr.bf16.mxu0 0
    %147 = vmatpush1.bf16.msra.mxu0 %v131
    %148 = vmatprep.subr.bf16.mxu0 0
    %149 = vmatpush1.bf16.msra.mxu0 %v130
    %150 = vmatprep.subr.bf16.mxu0 0
    %151 = vmatpush1.bf16.msra.mxu0 %v129
    %152 = vmatprep.subr.bf16.mxu0 0
    %153 = vmatpush1.bf16.msra.mxu0 %v128
    %154 = vmatprep.subr.bf16.mxu0 0
    %155 = vmatpush1.bf16.msra.mxu0 %v127
    %156 = vmatprep.subr.bf16.mxu0 0
    %157 = vmatpush1.bf16.msra.mxu0 %v126
    %158 = vmatprep.subr.bf16.mxu0 0
    %159 = vmatpush2.bf16.msra.mxu0 0
    %160 = vmatprep.subr.bf16.mxu0 0
    %161 = vmatpush2.bf16.msra.mxu0 0
    %162 = vmatprep.subr.bf16.mxu0 0
    %163 = vmatpush2.bf16.msra.mxu0 0
    %164 = vmatprep.subr.bf16.mxu0 0
    %165 = vmatpush2.bf16.msra.mxu0 0
    %166 = vmatprep.subr.bf16.mxu0 0
    %167 = vmatpush2.bf16.msra.mxu0 0
    %168 = vmatprep.subr.bf16.mxu0 0
    %169 = vmatpush2.bf16.msra.mxu0 0
    %170 = vmatprep.subr.bf16.mxu0 0
    %171 = vmatpush2.bf16.msra.mxu0 0
    %172 = vmatprep.subr.bf16.mxu0 0
    %173 = vmatpush2.bf16.msra.mxu0 0
    %174 = vmatprep.mubr.bf16.mxu0 0
    %175 = vmatmul.mubr.bf16.gmra.mxu0 %v92
    %v176 = vpop.f32.mrf.mxu0
    %v177 = vadd.f32 %v86, %v176
    %v178 = vpop.f32.mrf.mxu0
    %v179 = vpop.f32.mrf.mxu0
    %v180 = vadd.f32 %v86, %v179
    %v181 = vpop.f32.mrf.mxu0
    %182 = vdwg.mxu0
    %v183 = vmax.f32 %v177, 0.0
    %v184 = vmax.f32 %v180, 0.0
    %v185 = vpack.c.bf16 %v184, %v183
    %v186 = vld [vmem:[#allocation7] sm:$0xf]
    %v187 = vld [vmem:[#allocation7 + $0x4] sm:$0xf]
    %v188 = vld [vmem:[#allocation7 + $0x8] sm:$0xf]
    %v189 = vld [vmem:[#allocation7 + $0xc] sm:$0xf]
    %v190 = vld [vmem:[#allocation7 + $0x10] sm:$0xf]
    %v191 = vld [vmem:[#allocation7 + $0x14] sm:$0xf]
    %v192 = vld [vmem:[#allocation7 + $0x18] sm:$0xf]
    %v193 = vld [vmem:[#allocation7 + $0x1c] sm:$0xf]
    %v194 = vld [vmem:[#allocation7 + $0x20] sm:$0xf]
    %v195 = vld [vmem:[#allocation7 + $0x24] sm:$0xf]
    %v196 = vld [vmem:[#allocation7 + $0x28] sm:$0xf]
    %v197 = vld [vmem:[#allocation7 + $0x2c] sm:$0xf]
    %v198 = vld [vmem:[#allocation7 + $0x30] sm:$0xf]
    %v199 = vld [vmem:[#allocation7 + $0x34] sm:$0xf]
    %v200 = vld [vmem:[#allocation7 + $0x38] sm:$0xf]
    %v201 = vld [vmem:[#allocation7 + $0x3c] sm:$0xf]
    %v202 = vld [vmem:[%s4] sm:$0x1]
    %v204 = vlaneseq
    %v205 = vshrl.u32 %v204, 7
    %v206 = vsub.s32 0, %v205
    %v207 = vrot.slane %v202, %v206
    %v225 = vunpack.c.l.b16 %v186
    %v226 = vunpack.c.l.b16 %v187
    %v227 = vunpack.c.l.b16 %v188
    %v228 = vunpack.c.l.b16 %v189
    %v229 = vunpack.c.l.b16 %v190
    %v230 = vunpack.c.l.b16 %v191
    %v231 = vunpack.c.l.b16 %v192
    %v232 = vunpack.c.l.b16 %v193
    %v233 = vunpack.c.l.b16 %v194
    %v234 = vunpack.c.l.b16 %v195
    %v235 = vunpack.c.l.b16 %v196
    %v236 = vunpack.c.l.b16 %v197
    %v237 = vunpack.c.l.b16 %v198
    %v238 = vunpack.c.l.b16 %v199
    %v239 = vunpack.c.l.b16 %v200
    %v240 = vunpack.c.l.b16 %v201
    %v241 = vpack.c.b16 %v226, %v225
    %v242 = vpack.c.b16 %v228, %v227
    %v243 = vpack.c.b16 %v230, %v229
    %v244 = vpack.c.b16 %v232, %v231
    %v245 = vpack.c.b16 %v234, %v233
    %v246 = vpack.c.b16 %v236, %v235
    %v247 = vpack.c.b16 %v238, %v237
    %v248 = vpack.c.b16 %v240, %v239
    %257 = vmatprep.subr.bf16.mxu0 0
    %258 = vmatpush1.bf16.msra.mxu0 %v248
    %259 = vmatprep.subr.bf16.mxu0 0
    %260 = vmatpush1.bf16.msra.mxu0 %v247
    %261 = vmatprep.subr.bf16.mxu0 0
    %262 = vmatpush1.bf16.msra.mxu0 %v246
    %263 = vmatprep.subr.bf16.mxu0 0
    %264 = vmatpush1.bf16.msra.mxu0 %v245
    %265 = vmatprep.subr.bf16.mxu0 0
    %266 = vmatpush1.bf16.msra.mxu0 %v244
    %267 = vmatprep.subr.bf16.mxu0 0
    %268 = vmatpush1.bf16.msra.mxu0 %v243
    %269 = vmatprep.subr.bf16.mxu0 0
    %270 = vmatpush1.bf16.msra.mxu0 %v242
    %271 = vmatprep.subr.bf16.mxu0 0
    %272 = vmatpush1.bf16.msra.mxu0 %v241
    %273 = vmatprep.subr.bf16.mxu0 0
    %274 = vmatpush2.bf16.msra.mxu0 0
    %275 = vmatprep.subr.bf16.mxu0 0
    %276 = vmatpush2.bf16.msra.mxu0 0
    %277 = vmatprep.subr.bf16.mxu0 0
    %278 = vmatpush2.bf16.msra.mxu0 0
    %279 = vmatprep.subr.bf16.mxu0 0
    %280 = vmatpush2.bf16.msra.mxu0 0
    %281 = vmatprep.subr.bf16.mxu0 0
    %282 = vmatpush2.bf16.msra.mxu0 0
    %283 = vmatprep.subr.bf16.mxu0 0
    %284 = vmatpush2.bf16.msra.mxu0 0
    %285 = vmatprep.subr.bf16.mxu0 0
    %286 = vmatpush2.bf16.msra.mxu0 0
    %287 = vmatprep.subr.bf16.mxu0 0
    %288 = vmatpush2.bf16.msra.mxu0 0
    %289 = vmatprep.mubr.bf16.mxu0 0
    %290 = vmatmul.mubr.bf16.gmra.mxu0 %v185
    %v291 = vpop.f32.mrf.mxu0
    %v292 = vadd.f32 %v207, %v291
    %v293 = vpop.f32.mrf.mxu0
    %v294 = vpop.f32.mrf.mxu0
    %v295 = vadd.f32 %v207, %v294
    %v296 = vpop.f32.mrf.mxu0
    %297 = vdwg.mxu0
    %298 = vst [vmem:[#allocation8] sm:$0xff] %v292
    %299 = vst [vmem:[#allocation8 + $0x8] sm:$0xff] %v295
    // Predicated region
    $region34: #{tpu_custom_call.1} parent=1 // pred_check
      _
    $region35: #{tpu_custom_call.1} parent=1 // pred_check_branch
      %301 = sbr.rel (0) target = $region37
    $region36: #{tpu_custom_call.1} parent=1 // pred_region
      %s303 = ssub.s32 256, 256
      %304 = vsyncadd [#allocation4], %s303
      %s305 = sshll.u32 [#allocation8], 4
      %s306 = int_to_ptr.vmem [resolvable:$true] %s305
      %311 = dma.vmem_to_hbm [thread:$0]  %s306, 256, %s5, [#allocation4], 128, 128, 8
    $region37: #{tpu_custom_call.1} parent=1 // pred_fallthru
      _
    // Predicated region
    $region38: #{tpu_custom_call.1} parent=1 // pred_check
      _
    $region39: #{tpu_custom_call.1} parent=1 // pred_check_branch
      %313 = sbr.rel (0) target = $region41
    $region40: #{tpu_custom_call.1} parent=1 // pred_region
      %314 = dma.done [#allocation4], 256
    $region41: #{tpu_custom_call.1} parent=1 // pred_fallthru
      _
    %315 = vsyncpa [#allocation3], 1
    %316 = vsyncpa [#allocation6], 1
    %317 = vsyncpa [#allocation4], 1

</llo_original>
